<compile_context>
chip_gen: v7x
topology: tpu7x:2x2x1
jax: 0.10.0
libtpu: 0.0.40
codegen_flags: <defaults>
</compile_context>

<pallas_src>
import jax
import jax.numpy as jnp
from jax.experimental import pallas as pl
from jax.experimental.pallas import tpu as pltpu


# ---------------------------------------------------------------------------
# Kernels
# ---------------------------------------------------------------------------

def _sse_kernel_vpu(w_ref, x_ref, o_ref):
    """Small-C path.

    w_ref: SMEM (C,) float32  -- 1x1x1 conv weights (per-channel scalars).
    x_ref: VMEM (1, C, Ts, 128) input block (spatial on sublane+lane).
    o_ref: VMEM (1, C, Ts, 128) output block.
    """
    x = x_ref[0]                                    # (C, Ts, 128)
    C = x.shape[0]
    # Channel reduction: C-1 full-vreg VPU multiply-adds, f32 accumulation.
    q = x[0].astype(jnp.float32) * w_ref[0]
    for c in range(1, C):
        q = q + x[c].astype(jnp.float32) * w_ref[c]
    q = jax.nn.sigmoid(q)                           # (Ts, 128), EUP
    o_ref[0] = (x * q).astype(o_ref.dtype)          # broadcast over channels


def _sse_kernel_mxu(w_ref, x_ref, o_ref):
    """Large-C path (channel reduction on the MXU).

    w_ref: VMEM (1, C) in input dtype (pre-shaped in wrapper, no transpose).
    x_ref: VMEM (1, C, T) input block.
    o_ref: VMEM (1, C, T) output block.
    """
    x = x_ref[0]                                    # (C, T)
    q = jnp.dot(w_ref[...], x, preferred_element_type=jnp.float32)  # (1, T)
    q = jax.nn.sigmoid(q)
    o_ref[0] = (x * q).astype(o_ref.dtype)          # broadcast over channels


# ---------------------------------------------------------------------------
# Tiling heuristics
# ---------------------------------------------------------------------------

def _round_up(x, m):
    return ((x + m - 1) // m) * m


def _vmem_capacity_bytes():
    try:
        return int(pltpu.get_tpu_info().vmem_capacity_bytes)
    except Exception:
        return 64 * 1024 * 1024        # conservative fallback (v7x per-core)


def _vmem_limit_bytes():
    # Scoped-VMEM request: half of physical, capped at 64 MiB.
    #   v5e / v6e (128 MiB physical) -> 64 MiB (above their 16 / 32 MiB defaults)
    #   v7x       ( 64 MiB physical) -> 32 MiB (keeps double-buffering intact)
    return int(min(_vmem_capacity_bytes() // 2, 64 * 1024 * 1024))


def _choose_spatial_tile(s_pad, channels, dtype_bytes, batch, granule):
    """Largest lane count per block that fits the VMEM budget and divides s_pad."""
    budget = (_vmem_limit_bytes() * 3) // 4          # headroom for weight/scratch
    # Per grid step: double-buffered input + output blocks = 4 * C * tile elems.
    max_tile = budget // (4 * channels * dtype_bytes)
    max_tile = max(granule, (max_tile // granule) * granule)
    # Keep >= ~8 total grid steps when the volume allows it, so both v7x
    # TensorCores get work and the DMA pipeline has slack.
    tiles_per_batch = max(1, -(-8 // batch))
    cap = max(granule, (s_pad // tiles_per_batch // granule) * granule)
    tile = max(granule, min(max_tile, cap, s_pad))
    while s_pad % tile:
        tile -= granule
    return tile


# ---------------------------------------------------------------------------
# Wrapper
# ---------------------------------------------------------------------------

def sse_pallas(U, weight, *, spatial_tile=None):
    """sSE forward. U: (N, C, D, H, W); weight: Conv3d weight (1, C, 1, 1, 1)."""
    N, C, D, H, W = U.shape
    S = D * H * W
    dtype_bytes = jnp.dtype(U.dtype).itemsize

    use_mxu = C >= 128                  # MXU reduction only pays off at large C
    # VPU path folds spatial onto (sublane, lane) = (tile/128, 128); the sublane
    # extent of a block must be a multiple of 8, hence the coarser granule.
    granule = 128 if use_mxu else 8 * 128
    s_pad = _round_up(S, granule)

    x = U.reshape(N, C, S)
    if s_pad != S:
        x = jnp.pad(x, ((0, 0), (0, 0), (0, s_pad - S)))

    if spatial_tile is None:
        spatial_tile = _choose_spatial_tile(s_pad, C, dtype_bytes, N, granule)
    if spatial_tile % granule or s_pad % spatial_tile:
        raise ValueError(
            f"spatial_tile={spatial_tile} must be a multiple of {granule} "
            f"and divide the padded spatial size {s_pad}")

    grid = (N, s_pad // spatial_tile)
    cost = pl.CostEstimate(
        flops=3 * N * C * S,
        transcendentals=N * S,
        bytes_accessed=2 * N * C * S * dtype_bytes,
    )
    compiler_params = pltpu.CompilerParams(
        dimension_semantics=("parallel", "parallel"),
        vmem_limit_bytes=_vmem_limit_bytes(),
    )

    if use_mxu:
        kernel = _sse_kernel_mxu
        w = weight.reshape(1, C).astype(U.dtype)          # pre-shaped, no in-kernel T
        x_in = x
        in_specs = [
            pl.BlockSpec((1, C), lambda n, s: (0, 0)),                   # weight
            pl.BlockSpec((1, C, spatial_tile), lambda n, s: (n, 0, s)),  # input
        ]
        out_spec = pl.BlockSpec((1, C, spatial_tile), lambda n, s: (n, 0, s))
        out_shape = jax.ShapeDtypeStruct((N, C, s_pad), U.dtype)
    else:
        kernel = _sse_kernel_vpu
        w = weight.reshape(C).astype(jnp.float32)                        # SMEM scalars
        ts = spatial_tile // 128
        x_in = x.reshape(N, C, s_pad // 128, 128)
        in_specs = [
            pl.BlockSpec(memory_space=pltpu.MemorySpace.SMEM),           # weight
            pl.BlockSpec((1, C, ts, 128), lambda n, s: (n, 0, s, 0)),    # input
        ]
        out_spec = pl.BlockSpec((1, C, ts, 128), lambda n, s: (n, 0, s, 0))
        out_shape = jax.ShapeDtypeStruct((N, C, s_pad // 128, 128), U.dtype)

    out = pl.pallas_call(
        kernel,
        out_shape=out_shape,
        grid_spec=pltpu.PrefetchScalarGridSpec(
            num_scalar_prefetch=0,
            grid=grid,
            in_specs=in_specs,
            out_specs=out_spec,
        ),
        compiler_params=compiler_params,
        cost_estimate=cost,
    )(w, x_in)

    out = out.reshape(N, C, s_pad)
    if s_pad != S:
        out = out[:, :, :S]
    return out.reshape(N, C, D, H, W)


def sse_reference(U, weight):
    # Pure-JAX reference of the PyTorch forward.
    w = weight.reshape(1, -1, 1, 1, 1)
    q = jnp.sum(U * w, axis=1, keepdims=True)
    q = jax.nn.sigmoid(q)
    return U * q


if __name__ == "__main__":
    key = jax.random.PRNGKey(0)
    k_u, k_w, k_u2, k_w2 = jax.random.split(key, 4)

    # --- Small-C path (VPU reduction, spatial folded onto sublane+lane) -----
    N, C, D, H, W = 2, 4, 8, 8, 8
    U = jax.random.normal(k_u, (N, C, D, H, W), dtype=jnp.float32)
    weight = jax.random.normal(k_w, (1, C, 1, 1, 1), dtype=jnp.float32) * 0.1
    out = jax.block_until_ready(sse_pallas(U, weight))
    ref = sse_reference(U, weight)
    assert jnp.allclose(out, ref, atol=1e-5, rtol=1e-5), "small-C mismatch"

    # --- Large-C path (MXU reduction) ---------------------------------------
    N2, C2, D2, H2, W2 = 2, 128, 2, 8, 8
    U2 = jax.random.normal(k_u2, (N2, C2, D2, H2, W2), dtype=jnp.float32)
    weight2 = jax.random.normal(k_w2, (1, C2, 1, 1, 1), dtype=jnp.float32) * 0.05
    out2 = jax.block_until_ready(sse_pallas(U2, weight2))
    ref2 = sse_reference(U2, weight2)
    assert jnp.allclose(out2, ref2, atol=1e-4, rtol=1e-4), "large-C mismatch"

    print("KERNEL_OK")
</pallas_src>

<mosaic_0001>
module attributes {stable_mosaic.version = 11 : i64} {
  func.func @_sse_kernel_vpu(%arg0: i32, %arg1: i32, %arg2: memref<4xf32, #tpu.memory_space<smem>>, %arg3: memref<1x4x8x128xf32, #tpu.memory_space<vmem>>, %arg4: memref<1x4x8x128xf32, #tpu.memory_space<vmem>>) attributes {dimension_semantics = [#tpu.dimension_semantics<parallel>, #tpu.dimension_semantics<parallel>], iteration_bounds = array<i64: 2, 1>, scalar_prefetch = 0 : i64, scratch_operands = 0 : i64, tpu.core_type = #tpu.core_type<tc>, window_params = [{transform_indices = @transform_0, window_bounds = array<i64: 4>}, {transform_indices = @transform_1, window_bounds = array<i64: 1, 4, 8, 128>}, {transform_indices = @transform_2, window_bounds = array<i64: 1, 4, 8, 128>}]} {
    %c0 = arith.constant 0 : index
    %c0_0 = arith.constant 0 : index
    %c0_1 = arith.constant 0 : index
    %c0_2 = arith.constant 0 : index
    %0 = vector.load %arg3[%c0, %c0_0, %c0_1, %c0_2] : memref<1x4x8x128xf32, #tpu.memory_space<vmem>>, vector<1x4x8x128xf32>
    %1 = vector.shape_cast %0 : vector<1x4x8x128xf32> to vector<4x8x128xf32>
    %2 = vector.extract_strided_slice %1 {offsets = [0, 0, 0], sizes = [1, 8, 128], strides = [1, 1, 1]} : vector<4x8x128xf32> to vector<1x8x128xf32>
    %3 = vector.shape_cast %2 : vector<1x8x128xf32> to vector<8x128xf32>
    %c0_3 = arith.constant 0 : index
    %4 = memref.load %arg2[%c0_3] : memref<4xf32, #tpu.memory_space<smem>>
    %5 = vector.broadcast %4 : f32 to vector<8x128xf32>
    %6 = arith.mulf %3, %5 : vector<8x128xf32>
    %7 = vector.extract_strided_slice %1 {offsets = [1, 0, 0], sizes = [1, 8, 128], strides = [1, 1, 1]} : vector<4x8x128xf32> to vector<1x8x128xf32>
    %8 = vector.shape_cast %7 : vector<1x8x128xf32> to vector<8x128xf32>
    %c1 = arith.constant 1 : index
    %9 = memref.load %arg2[%c1] : memref<4xf32, #tpu.memory_space<smem>>
    %10 = vector.broadcast %9 : f32 to vector<8x128xf32>
    %11 = arith.mulf %8, %10 : vector<8x128xf32>
    %12 = arith.addf %6, %11 : vector<8x128xf32>
    %13 = vector.extract_strided_slice %1 {offsets = [2, 0, 0], sizes = [1, 8, 128], strides = [1, 1, 1]} : vector<4x8x128xf32> to vector<1x8x128xf32>
    %14 = vector.shape_cast %13 : vector<1x8x128xf32> to vector<8x128xf32>
    %c2 = arith.constant 2 : index
    %15 = memref.load %arg2[%c2] : memref<4xf32, #tpu.memory_space<smem>>
    %16 = vector.broadcast %15 : f32 to vector<8x128xf32>
    %17 = arith.mulf %14, %16 : vector<8x128xf32>
    %18 = arith.addf %12, %17 : vector<8x128xf32>
    %19 = vector.extract_strided_slice %1 {offsets = [3, 0, 0], sizes = [1, 8, 128], strides = [1, 1, 1]} : vector<4x8x128xf32> to vector<1x8x128xf32>
    %20 = vector.shape_cast %19 : vector<1x8x128xf32> to vector<8x128xf32>
    %c3 = arith.constant 3 : index
    %21 = memref.load %arg2[%c3] : memref<4xf32, #tpu.memory_space<smem>>
    %22 = vector.broadcast %21 : f32 to vector<8x128xf32>
    %23 = arith.mulf %20, %22 : vector<8x128xf32>
    %24 = arith.addf %18, %23 : vector<8x128xf32>
    %25 = arith.negf %24 : vector<8x128xf32>
    %26 = math.exp %25 : vector<8x128xf32>
    %cst = arith.constant 1.000000e+00 : f32
    %27 = vector.broadcast %cst : f32 to vector<8x128xf32>
    %28 = arith.addf %27, %26 : vector<8x128xf32>
    %29 = arith.divf %27, %28 : vector<8x128xf32>
    %30 = vector.shape_cast %29 : vector<8x128xf32> to vector<1x8x128xf32>
    %31 = vector.broadcast %30 : vector<1x8x128xf32> to vector<4x8x128xf32>
    %32 = arith.mulf %1, %31 : vector<4x8x128xf32>
    %c0_4 = arith.constant 0 : index
    %c0_5 = arith.constant 0 : index
    %c0_6 = arith.constant 0 : index
    %c0_7 = arith.constant 0 : index
    %33 = vector.load %arg4[%c0_4, %c0_5, %c0_6, %c0_7] : memref<1x4x8x128xf32, #tpu.memory_space<vmem>>, vector<1x4x8x128xf32>
    %34 = vector.shape_cast %33 : vector<1x4x8x128xf32> to vector<4x8x128xf32>
    %35 = vector.shape_cast %32 : vector<4x8x128xf32> to vector<1x4x8x128xf32>
    tpu.vector_store %arg4[%c0_4, %c0_5, %c0_6, %c0_7], %35 {strides = array<i32>} : memref<1x4x8x128xf32, #tpu.memory_space<vmem>>, vector<1x4x8x128xf32>,
    return
  }
  func.func @transform_0(%arg0: i32, %arg1: i32) -> i32 {
    %c0_i32 = arith.constant 0 : i32
    %c0_i32_0 = arith.constant 0 : i32
    return %c0_i32 : i32
  }
  func.func @transform_1(%arg0: i32, %arg1: i32) -> (i32, i32, i32, i32) {
    %c0_i32 = arith.constant 0 : i32
    %c0_i32_0 = arith.constant 0 : i32
    %c0_i32_1 = arith.constant 0 : i32
    return %arg0, %c0_i32, %arg1, %c0_i32_0 : i32, i32, i32, i32
  }
  func.func @transform_2(%arg0: i32, %arg1: i32) -> (i32, i32, i32, i32) {
    %c0_i32 = arith.constant 0 : i32
    %c0_i32_0 = arith.constant 0 : i32
    %c0_i32_1 = arith.constant 0 : i32
    return %arg0, %c0_i32, %arg1, %c0_i32_0 : i32, i32, i32, i32
  }
}

</mosaic_0001>

<llo_original>
// kernel: tpu_custom_call.1
$region0: #{tpu_custom_call.1}
  #allocation0 [shape = 'u32[]', space=smem, size = 0x4, offset = 0x4, fixed_abs, tag = 'smem constant byte address 0x4 - core index']
  #allocation1 [shape = 'u32[144,128]{1,0:T(1,128)}', space=vmem, size = 0x12000, scoped, tag = 'internal scratch']
  %s0 = inlined_call_operand.hbm [shape: f32[4], index: 0, kind: input, shape index: {}]
  %s1 = inlined_call_operand.hbm [shape: f32[2,4,8,128], index: 1, kind: input, shape index: {}]
  %s2 = inlined_call_operand.hbm [shape: f32[2,4,8,128], index: 2, kind: output, shape index: {}]
  %s3 = sld [smem:[#allocation0]]
  $region49: #{tpu_custom_call.1} parent=0
    _
  %s5 = ssub.s32 1, %s3
  %s6 = scalar_select 0, %s5, %s3
  $region1: #{tpu_custom_call.1} parent=0
    #allocation2 [shape = 'u8[512]{0}', space=smem, size = 0x200, scoped, tag = 'input window, operand 0, single buffered']
    #allocation3 [shape = 's32[2]{0}', space=sflag, size = 0x8, scoped, tag = 'scoped memory for tpu_custom_call.1']
    #allocation4 [shape = 's32[2]{0}', space=sflag, size = 0x8, scoped, tag = 'scoped memory for tpu_custom_call.1']
    #allocation5 [shape = 's32[2]{0}', space=sflag, size = 0x8, scoped, tag = 'scoped memory for tpu_custom_call.1']
    #allocation6 [shape = 'u8[32768]{0}', space=vmem, size = 0x8000, scoped, tag = 'input window, operand 1']
    #allocation7 [shape = 'u8[32768]{0}', space=vmem, size = 0x8000, scoped, tag = 'output window, operand 0']
    %7 = vsyncpa [#allocation5], 0
    %8 = vsyncpa [#allocation3], 0
    %s9 = scalar_lea.sflag [#allocation3], 1
    %10 = vsyncpa %s9, 0
    %11 = vsyncpa [#allocation4], 0
    %s12 = scalar_lea.sflag [#allocation4], 1
    %13 = vsyncpa %s12, 0
    loop: start=0, step=1, limit=4
    $region2: #{tpu_custom_call.1} parent=1 // loop_pre_header
      _
    $region3: #{tpu_custom_call.1} parent=1 // loop_header
      %s15 = sphi 0, %s19
      %p16 = scmp.ge.s32.totalorder %s15, 4
      %s22 = sphi 0, %s34
      %s23 = sphi 0, %s30
      %s24 = sphi 0, %s22
      %s25 = sphi 0, %s23
      %s26 = sphi 0, %s24
      %s27 = sphi 0, %s25
      %s35 = sphi 0, %s35
      %s37 = sphi 0, %s35
      %s38 = sphi 0, %s37
      %s52 = sphi 0, %s38
      %s60 = sphi 0, %s62
      %s63 = sphi 0, %s60
      %s64 = sphi 0, %s63
      %s80 = sphi 0, %s64
      %s88 = sphi 0, %s90
      %s91 = sphi 0, %s88
      %s92 = sphi 0, %s91
      %s108 = sphi 0, %s92
    $region4: #{tpu_custom_call.1} parent=1 // loop_header_branch
      %18 = sbr.rel (%p16) target = $region8
    $region5: #{tpu_custom_call.1} parent=1 // loop_body
      %s20 = ssub.s32 %s15, 1
      %s21 = ssub.s32 %s15, 2
      %s28 = sadd.s32 1, %s23
      %p29 = scmp.ge.s32.totalorder %s28, 1
      %s30 = scalar_select %p29, 0, %s28
      %s31 = sadd.s32 1, %s22
      %s32 = scalar_select %p29, %s31, %s22
      %p33 = scmp.ge.s32.totalorder %s32, 2
      %s34 = scalar_select %p33, 0, %s32
      %s36 = sadd.s32 %s35, 1
      %p39 = scmp.eq.s32.totalorder %s15, 1
      %p40 = scmp.ne.s32.totalorder %s35, %s37
      %p41 = scmp.eq.s32.totalorder %s15, 0
      %p42 = por %p40, %p41
      %p43 = scmp.ne.s32.totalorder %s35, %s37
      %p44 = scmp.eq.s32.totalorder %s20, 1
      %p45 = por %p43, %p44
      %p46 = scmp.ne.s32.totalorder %s37, %s38
      %p47 = scmp.eq.s32.totalorder %s20, 0
      %p48 = por %p46, %p47
      %p49 = scmp.ne.s32.totalorder %s37, %s38
      %p50 = scmp.eq.s32.totalorder %s21, 1
      %p51 = por %p49, %p50
      %p53 = scmp.ne.s32.totalorder %s38, %s52
      %p54 = scmp.eq.s32.totalorder %s21, 0
      %p55 = por %p53, %p54
      %s56 = ssub.s32 %s22, %s34
      %s57 = ssub.s32 %s23, %s30
      %s58 = sor.u32 %s56, %s57
      %p59 = scmp.eq.s32.totalorder %s58, 0
      %s61 = sadd.s32 %s60, 1
      %s62 = scalar_select %p59, %s60, %s61
      %p65 = pneg %p59
      %p66 = scmp.eq.s32.totalorder %s15, 1
      %p67 = por %p65, %p66
      %p68 = scmp.ne.s32.totalorder %s60, %s63
      %p69 = scmp.eq.s32.totalorder %s15, 0
      %p70 = por %p68, %p69
      %p71 = scmp.ne.s32.totalorder %s60, %s63
      %p72 = scmp.eq.s32.totalorder %s20, 1
      %p73 = por %p71, %p72
      %p74 = scmp.ne.s32.totalorder %s63, %s64
      %p75 = scmp.eq.s32.totalorder %s20, 0
      %p76 = por %p74, %p75
      %p77 = scmp.ne.s32.totalorder %s63, %s64
      %p78 = scmp.eq.s32.totalorder %s21, 1
      %p79 = por %p77, %p78
      %p81 = scmp.ne.s32.totalorder %s64, %s80
      %p82 = scmp.eq.s32.totalorder %s21, 0
      %p83 = por %p81, %p82
      %s84 = ssub.s32 %s22, %s34
      %s85 = ssub.s32 %s23, %s30
      %s86 = sor.u32 %s84, %s85
      %p87 = scmp.eq.s32.totalorder %s86, 0
      %s89 = sadd.s32 %s88, 1
      %s90 = scalar_select %p87, %s88, %s89
      %p93 = pneg %p87
      %p94 = scmp.eq.s32.totalorder %s15, 1
      %p95 = por %p93, %p94
      %p96 = scmp.ne.s32.totalorder %s88, %s91
      %p97 = scmp.eq.s32.totalorder %s15, 0
      %p98 = por %p96, %p97
      %p99 = scmp.ne.s32.totalorder %s88, %s91
      %p100 = scmp.eq.s32.totalorder %s20, 1
      %p101 = por %p99, %p100
      %p102 = scmp.ne.s32.totalorder %s91, %s92
      %p103 = scmp.eq.s32.totalorder %s20, 0
      %p104 = por %p102, %p103
      %p105 = scmp.ne.s32.totalorder %s91, %s92
      %p106 = scmp.eq.s32.totalorder %s21, 1
      %p107 = por %p105, %p106
      %p109 = scmp.ne.s32.totalorder %s92, %s108
      %p110 = scmp.eq.s32.totalorder %s21, 0
      %p111 = por %p109, %p110
      %p112 = scmp.le.s32.totalorder 1, %s15
      %p113 = scmp.lt.s32.totalorder %s15, 3
      %p114 = pnand %p112, %p113
      %p115 = pneg %p114
      // Predicated region
      $region9: #{tpu_custom_call.1} parent=5 // pred_check
        _
      $region10: #{tpu_custom_call.1} parent=5 // pred_check_branch
        %117 = sbr.rel (%p114) target = $region12
      $region11: #{tpu_custom_call.1} parent=5 // pred_region
        %s118 = ssub.s32 %s15, 1
        // Predicated region
        $region13: #{tpu_custom_call.1} parent=11 // pred_check
          %p119 = pneg %p48
        $region14: #{tpu_custom_call.1} parent=11 // pred_check_branch
          %121 = sbr.rel (%p119) target = $region16
        $region15: #{tpu_custom_call.1} parent=11 // pred_region
          %s123 = ssub.s32 16, 16
          %124 = vsyncadd [#allocation5], %s123
          %127 = dma.hbm_to_smem %s0, 16, [#allocation2], [#allocation5]
        $region16: #{tpu_custom_call.1} parent=11 // pred_fallthru
          _
      $region12: #{tpu_custom_call.1} parent=5 // pred_fallthru
        _
      %p128 = scmp.lt.s32.totalorder %s15, 2
      // Predicated region
      $region17: #{tpu_custom_call.1} parent=5 // pred_check
        %p129 = pneg %p128
      $region18: #{tpu_custom_call.1} parent=5 // pred_check_branch
        %131 = sbr.rel (%p129) target = $region20
      $region19: #{tpu_custom_call.1} parent=5 // pred_region
        // Predicated region
        $region21: #{tpu_custom_call.1} parent=19 // pred_check
          %p132 = pneg %p70
        $region22: #{tpu_custom_call.1} parent=19 // pred_check_branch
          %134 = sbr.rel (%p132) target = $region24
        $region23: #{tpu_custom_call.1} parent=19 // pred_region
          %s135 = sand.u32 %s60, 1
          %s136 = scalar_lea.sflag [#allocation3], %s135
          %s137 = sand.u32 %s60, 1
          %s138 = smul.addr %s137, 32
          %s139 = scalar_lea.vmem [#allocation6], %s138
          %s141 = ssub.s32 512, 512
          %142 = vsyncadd %s136, %s141
          %s143 = smul.addr %s22, 4
          %s144 = sadd.s32 %s23, %s143
          %s145 = smul.addr %s144, 128
          %s146 = scalar_lea.hbm %s1, %s145
          %s147 = sshll.u32 %s139, 4
          %s148 = int_to_ptr.vmem [resolvable:$true] %s147
          %153 = dma.hbm_to_vmem [thread:$0]  %s146, 512, %s148, %s136, 128, 128, 8
        $region24: #{tpu_custom_call.1} parent=19 // pred_fallthru
          _
      $region20: #{tpu_custom_call.1} parent=5 // pred_fallthru
        _
      %p154 = scmp.le.s32.totalorder 1, %s15
      %p155 = scmp.lt.s32.totalorder %s15, 3
      %p156 = pnand %p154, %p155
      %p157 = pneg %p156
      // Predicated region
      $region25: #{tpu_custom_call.1} parent=5 // pred_check
        _
      $region26: #{tpu_custom_call.1} parent=5 // pred_check_branch
        %159 = sbr.rel (%p156) target = $region28
      $region27: #{tpu_custom_call.1} parent=5 // pred_region
        %s160 = ssub.s32 %s15, 1
        // Predicated region
        $region29: #{tpu_custom_call.1} parent=27 // pred_check
          %p161 = pneg %p48
        $region30: #{tpu_custom_call.1} parent=27 // pred_check_branch
          %163 = sbr.rel (%p161) target = $region32
        $region31: #{tpu_custom_call.1} parent=27 // pred_region
          %164 = dma.done [#allocation5], 16
        $region32: #{tpu_custom_call.1} parent=27 // pred_fallthru
          _
        %s165 = sand.u32 %s63, 1
        %s166 = scalar_lea.sflag [#allocation3], %s165
        %s167 = sand.u32 %s63, 1
        %s168 = smul.addr %s167, 32
        %s169 = scalar_lea.vmem [#allocation6], %s168
        // Predicated region
        $region33: #{tpu_custom_call.1} parent=27 // pred_check
          %p170 = pneg %p76
        $region34: #{tpu_custom_call.1} parent=27 // pred_check_branch
          %172 = sbr.rel (%p170) target = $region36
        $region35: #{tpu_custom_call.1} parent=27 // pred_region
          %173 = dma.done %s166, 512
        $region36: #{tpu_custom_call.1} parent=27 // pred_fallthru
          _
        %174 = sfence
        %p175 = pneg %p48
        %p176 = pneg %p45
        %s177 = sand.u32 %s63, 1
        %s178 = scalar_lea.sflag [#allocation3], %s177
        %s179 = sand.u32 %s63, 1
        %s180 = smul.addr %s179, 32
        %s181 = scalar_lea.vmem [#allocation6], %s180
        %p182 = pneg %p76
        %p183 = pneg %p73
        %p184 = pneg %p104
        %p185 = pneg %p101
        %s186 = sand.u32 %s91, 1
        %s187 = scalar_lea.sflag [#allocation4], %s186
        %s188 = sand.u32 %s91, 1
        %s189 = smul.addr %s188, 32
        %s190 = scalar_lea.vmem [#allocation7], %s189
        %v191 = vld [vmem:[%s169] sm:$0xff]
        %v192 = vld [vmem:[%s169 + $0x8] sm:$0xff]
        %v193 = vld [vmem:[%s169 + $0x10] sm:$0xff]
        %v194 = vld [vmem:[%s169 + $0x18] sm:$0xff]
        %s195 = sld [smem:[#allocation2]]
        %v196 = vstv %s195
        %v197 = vmul.f32 %v191, %v196
        %s198 = sld [smem:[#allocation2 + $0x1]]
        %v199 = vstv %s198
        %v200 = vmul.f32 %v192, %v199
        %v201 = vadd.f32 %v197, %v200
        %s202 = sld [smem:[#allocation2 + $0x2]]
        %v203 = vstv %s202
        %v204 = vmul.f32 %v193, %v203
        %v205 = vadd.f32 %v201, %v204
        %s206 = sld [smem:[#allocation2 + $0x3]]
        %v207 = vstv %s206
        %v208 = vmul.f32 %v194, %v207
        %v209 = vadd.f32 %v205, %v208
        %v210 = vxor.u32 %v209, 2147483648
        %v211 = vmul.f32 %v210, 1.442695
        %v212 = vpow.pop %v211
        %v213 = vadd.f32 %v212, 1.0
        %v214 = vrcp.pop %v213
        %v215 = vmul.f32 1.0, %v214
        %v216 = vmul.f32 %v191, %v215
        %v217 = vmul.f32 %v192, %v215
        %v218 = vmul.f32 %v193, %v215
        %v219 = vmul.f32 %v194, %v215
        %220 = vst [vmem:[%s190] sm:$0xff] %v216
        %221 = vst [vmem:[%s190 + $0x8] sm:$0xff] %v217
        %222 = vst [vmem:[%s190 + $0x10] sm:$0xff] %v218
        %223 = vst [vmem:[%s190 + $0x18] sm:$0xff] %v219
        %s224 = sand.u32 %s91, 1
        %s225 = scalar_lea.sflag [#allocation4], %s224
        %s226 = sand.u32 %s91, 1
        %s227 = smul.addr %s226, 32
        %s228 = scalar_lea.vmem [#allocation7], %s227
        // Predicated region
        $region37: #{tpu_custom_call.1} parent=27 // pred_check
          %p229 = pneg %p101
        $region38: #{tpu_custom_call.1} parent=27 // pred_check_branch
          %231 = sbr.rel (%p229) target = $region40
        $region39: #{tpu_custom_call.1} parent=27 // pred_region
          %s233 = ssub.s32 512, 512
          %234 = vsyncadd %s225, %s233
          %s235 = smul.addr %s24, 4
          %s236 = sadd.s32 %s25, %s235
          %s237 = smul.addr %s236, 128
          %s238 = scalar_lea.hbm %s2, %s237
          %s239 = sshll.u32 %s228, 4
          %s240 = int_to_ptr.vmem [resolvable:$true] %s239
          %245 = dma.vmem_to_hbm [thread:$0]  %s240, 512, %s238, %s225, 128, 128, 8
        $region40: #{tpu_custom_call.1} parent=27 // pred_fallthru
          _
      $region28: #{tpu_custom_call.1} parent=5 // pred_fallthru
        _
      %p246 = scmp.le.s32.totalorder 2, %s15
      // Predicated region
      $region41: #{tpu_custom_call.1} parent=5 // pred_check
        %p247 = pneg %p246
      $region42: #{tpu_custom_call.1} parent=5 // pred_check_branch
        %249 = sbr.rel (%p247) target = $region44
      $region43: #{tpu_custom_call.1} parent=5 // pred_region
        %s250 = ssub.s32 %s15, 2
        // Predicated region
        $region45: #{tpu_custom_call.1} parent=43 // pred_check
          %p251 = pneg %p107
        $region46: #{tpu_custom_call.1} parent=43 // pred_check_branch
          %253 = sbr.rel (%p251) target = $region48
        $region47: #{tpu_custom_call.1} parent=43 // pred_region
          %s254 = sand.u32 %s92, 1
          %s255 = scalar_lea.sflag [#allocation4], %s254
          %s256 = sand.u32 %s92, 1
          %s257 = smul.addr %s256, 32
          %s258 = scalar_lea.vmem [#allocation7], %s257
          %259 = dma.done %s255, 512
        $region48: #{tpu_custom_call.1} parent=43 // pred_fallthru
          _
      $region44: #{tpu_custom_call.1} parent=5 // pred_fallthru
        _
    $region6: #{tpu_custom_call.1} parent=1 // loop_footer
      %s19 = sadd.s32 1, %s15
    $region7: #{tpu_custom_call.1} parent=1 // loop_footer_branch
      %14 = sbr.rel target = $region3
    $region8: #{tpu_custom_call.1} parent=1 // loop_exit
      _
    %260 = vsyncpa [#allocation3], 1
    %s261 = scalar_lea.sflag [#allocation3], 1
    %262 = vsyncpa %s261, 1
    %263 = vsyncpa [#allocation4], 1
    %s264 = scalar_lea.sflag [#allocation4], 1
    %265 = vsyncpa %s264, 1
    %266 = vsyncpa [#allocation5], 1
    %s267 = scalar_lea.sflag [#allocation5], 1
    %268 = vsyncpa %s267, 1

</llo_original>
